<compile_context>
chip_gen: v5e
topology: v5e:2x2
jax: 0.10.0
libtpu: 0.0.40
codegen_flags: <defaults>
</compile_context>

<pallas_src>
import functools

import jax
import jax.numpy as jnp
from jax import lax
from jax.experimental import pallas as pl
from jax.experimental.pallas import tpu as pltpu


def _attn_kernel(*refs,
                 head_dim, heads_per_group, q_block,
                 has_mask, return_attn, approx_recip, exp_dtype):
    it = iter(refs)
    x_ref = next(it)
    mask_ref = next(it) if has_mask else None
    wq_ref = next(it)
    bq_ref = next(it)
    wkv_ref = next(it)
    bkv_ref = next(it)
    wo_ref = next(it)
    bo_ref = next(it)
    out_ref = next(it)
    attn_ref = next(it) if return_attn else None
    acc_ref = next(it)

    qt = pl.program_id(1)
    g = pl.program_id(2)
    n_groups = pl.num_programs(2)

    G = heads_per_group
    hd = head_dim
    ghd = G * hd

    x_view = x_ref.at[0]                     # [T, D] ref view (zero-cost static slice)
    x = x_view[...]                          # full sequence for K/V, model dtype (no upcast)
    cdt = x.dtype
    seq_len = x.shape[0]

    if q_block < seq_len:                    # q-tile rows only for the Q projection
        row0 = pl.multiple_of(qt * q_block, q_block)
        x_q = x_view[pl.ds(row0, q_block), :]
    else:
        x_q = x

    # Per-group weight slabs; full tensors stay resident in VMEM, this is just an index.
    wq_g = wq_ref[g]                         # [D, G*hd]   (1/sqrt(hd) folded in)
    bq_g = bq_ref[g]                         # [1, G*hd]
    wkv_g = wkv_ref[g]                       # [D, 2*G*hd] (K columns then V columns)
    bkv_g = bkv_ref[g]                       # [1, 2*G*hd]
    wo_g = wo_ref[g]                         # [G*hd, D]

    # Fused, lane-dense projections: one MXU pass of width G*hd (Q) and one of 2*G*hd (K/V).
    q_all = (jnp.dot(x_q, wq_g, preferred_element_type=jnp.float32) + bq_g).astype(cdt)
    kv = (jnp.dot(x, wkv_g, preferred_element_type=jnp.float32) + bkv_g).astype(cdt)
    k_all = kv[:, :ghd]
    v_all = kv[:, ghd:]

    if has_mask:
        mask = mask_ref[0, 0].astype(jnp.float32)            # [tq, T]

    pv_parts = []
    for i in range(G):                                        # small static unroll over grouped heads
        q_i = q_all[:, i * hd:(i + 1) * hd]
        k_i = k_all[:, i * hd:(i + 1) * hd]
        v_i = v_all[:, i * hd:(i + 1) * hd]

        # scores = q @ k^T (contract last dims, no explicit transpose relayout).
        s = lax.dot_general(q_i, k_i, (((1,), (1,)), ((), ())),
                            preferred_element_type=jnp.float32)   # [tq, T]
        if has_mask:
            s = s + mask

        # f32 softmax (matches torch softmax(dim=-1, dtype=float32)).
        s = s - jnp.max(s, axis=-1, keepdims=True)
        if exp_dtype is not None:            # optional bf16 exp on v6e/v7x (EUP 2x rate)
            e = jnp.exp(s.astype(exp_dtype)).astype(jnp.float32)
        else:
            e = jnp.exp(s)
        denom = jnp.sum(e, axis=-1, keepdims=True)
        p = (e * pl.reciprocal(denom, approx=approx_recip)).astype(cdt)

        if return_attn:
            attn_ref[0, i] = p.astype(attn_ref.dtype)

        # TODO(synk): attention dropout is identity in eval mode (training=False).
        pv_parts.append(jnp.dot(p, v_i, preferred_element_type=jnp.float32).astype(cdt))

    pv_grp = pv_parts[0] if G == 1 else jnp.concatenate(pv_parts, axis=-1)   # [tq, G*hd]
    contrib = jnp.dot(pv_grp, wo_g, preferred_element_type=jnp.float32)       # [tq, D]

    @pl.when(g == 0)
    def _init():
        acc_ref[...] = jnp.broadcast_to(bo_ref[...].astype(jnp.float32), acc_ref.shape)

    acc_ref[...] += contrib

    @pl.when(g == n_groups - 1)
    def _finalize():
        out_ref[0] = acc_ref[...].astype(out_ref.dtype)


def _pick_heads_per_group(num_heads, head_dim, target=256):
    # Largest divisor G of H such that G*head_dim <= target (MXU-width / VMEM trade-off).
    for cand in range(num_heads, 0, -1):
        if num_heads % cand == 0 and cand * head_dim <= target:
            return cand
    return 1


def _pick_q_block(seq_len):
    # Only q-tile when sequences are long enough that [T,T] f32 temporaries get large.
    if seq_len <= 512:
        return seq_len
    for cand in (512, 256, 128):
        if seq_len % cand == 0:
            return cand
    return seq_len


def _vmem_limit_bytes():
    # Generation-aware VMEM budget (v7x: 64 MiB/TC physical, v5e/v6e: 128 MiB).
    try:
        cap = int(pltpu.get_tpu_info().vmem_capacity_bytes)
        return (cap * 13) // 16            # ~52 MiB on v7x, ~104 MiB on v5e/v6e
    except Exception:
        return None                         # fall back to compiler default


def siglip2_attention(hidden_states, attention_mask, params, *,
                      num_heads,
                      output_attentions=False,
                      heads_per_group=None,
                      q_block_size=None,
                      approx_reciprocal=False,
                      softmax_exp_dtype=None):
    """hidden_states: [B, T, D]; attention_mask: [B, 1, T, T] additive, or None."""
    B, T, D = hidden_states.shape
    head_dim = D // num_heads
    assert head_dim * num_heads == D
    cdt = hidden_states.dtype

    wq, bq, wk, bk, wv, bv, wo, bo = params

    G = heads_per_group if heads_per_group is not None else _pick_heads_per_group(num_heads, head_dim)
    assert num_heads % G == 0
    n_groups = num_heads // G
    ghd = G * head_dim

    tq = q_block_size if q_block_size is not None else _pick_q_block(T)
    assert T % tq == 0 and (tq == T or tq % 8 == 0)
    n_qt = T // tq

    # ---------------- wrapper-side weight plumbing (one-time, outside the kernel) ----
    scale = float(head_dim) ** -0.5
    wq_s = (wq.astype(jnp.float32) * scale).astype(wq.dtype)   # fold 1/sqrt(hd) into Q
    bq_s = (bq.astype(jnp.float32) * scale).astype(bq.dtype)

    def group_cols(w):                                          # [D, D] -> [n_groups, D, G*hd]
        return w.reshape(D, n_groups, ghd).transpose(1, 0, 2)

    wq_g = group_cols(wq_s)
    wkv_g = jnp.concatenate([group_cols(wk), group_cols(wv)], axis=-1)     # [n_groups, D, 2*G*hd]
    bq_g = bq_s.reshape(n_groups, 1, ghd)
    bkv_g = jnp.concatenate([bk.reshape(n_groups, 1, ghd),
                             bv.reshape(n_groups, 1, ghd)], axis=-1)
    wo_g = wo.reshape(n_groups, ghd, D)                                     # rows head-major

    has_mask = attention_mask is not None
    if has_mask:
        attention_mask = attention_mask.astype(cdt)   # halves mask HBM traffic for bf16 models

    kernel = functools.partial(
        _attn_kernel,
        head_dim=head_dim, heads_per_group=G, q_block=tq,
        has_mask=has_mask, return_attn=output_attentions,
        approx_recip=approx_reciprocal, exp_dtype=softmax_exp_dtype)

    resident = pl.BlockSpec(memory_space=pltpu.MemorySpace.VMEM)   # copied once, stays resident

    in_specs = [pl.BlockSpec((1, T, D), lambda b, q, g: (b, 0, 0))]        # x (full seq per batch)
    inputs = [hidden_states]
    if has_mask:
        in_specs.append(pl.BlockSpec((1, 1, tq, T), lambda b, q, g: (b, 0, q, 0)))
        inputs.append(attention_mask)
    in_specs += [resident] * 6
    inputs += [wq_g, bq_g, wkv_g, bkv_g, wo_g, bo]

    out_shapes = [jax.ShapeDtypeStruct((B, T, D), cdt)]
    out_specs = [pl.BlockSpec((1, tq, D), lambda b, q, g: (b, q, 0))]
    if output_attentions:
        out_shapes.append(jax.ShapeDtypeStruct((B, num_heads, T, T), cdt))
        out_specs.append(pl.BlockSpec((1, G, tq, T), lambda b, q, g: (b, g, q, 0)))

    cp_kwargs = dict(dimension_semantics=("parallel", "parallel", "arbitrary"))
    vmem_limit = _vmem_limit_bytes()
    if vmem_limit is not None:
        cp_kwargs["vmem_limit_bytes"] = vmem_limit

    results = pl.pallas_call(
        kernel,
        out_shape=tuple(out_shapes),
        grid=(B, n_qt, n_groups),
        in_specs=in_specs,
        out_specs=tuple(out_specs),
        scratch_shapes=[pltpu.VMEM((tq, D), jnp.float32)],     # out_proj accumulator over groups
        compiler_params=pltpu.CompilerParams(**cp_kwargs),
    )(*inputs)

    if output_attentions:
        return results
    return results[0], None


def _reference(hidden_states, attention_mask, params, num_heads):
    """Plain-JAX replica of the PyTorch forward for verification."""
    wq, bq, wk, bk, wv, bv, wo, bo = params
    B, T, D = hidden_states.shape
    hd = D // num_heads
    scale = hd ** -0.5
    q = hidden_states @ wq + bq[0]
    k = hidden_states @ wk + bk[0]
    v = hidden_states @ wv + bv[0]
    reshape = lambda t: t.reshape(B, T, num_heads, hd).transpose(0, 2, 1, 3)
    q, k, v = reshape(q), reshape(k), reshape(v)
    s = jnp.einsum("bhqd,bhkd->bhqk", q, k) * scale
    if attention_mask is not None:
        s = s + attention_mask
    p = jax.nn.softmax(s.astype(jnp.float32), axis=-1).astype(q.dtype)
    o = jnp.einsum("bhqk,bhkd->bhqd", p, v)
    o = o.transpose(0, 2, 1, 3).reshape(B, T, D)
    return o @ wo + bo[0], p


if __name__ == "__main__":
    def make_case(key, B, T, D):
        keys = jax.random.split(key, 10)
        x = jax.random.normal(keys[0], (B, T, D), jnp.float32)
        mask = 0.1 * jax.random.normal(keys[1], (B, 1, T, T), jnp.float32)
        params = []
        for i in range(4):
            params.append(0.02 * jax.random.normal(keys[2 + 2 * i], (D, D), jnp.float32))
            params.append(0.02 * jax.random.normal(keys[3 + 2 * i], (1, D), jnp.float32))
        return x, mask, tuple(params)

    key = jax.random.PRNGKey(0)
    k1, k2 = jax.random.split(key)

    # --- Case 1: small shapes, default grouping (single group, no q-tiling) ----------
    B, T, D, H = 2, 8, 32, 4
    x, mask, params = make_case(k1, B, T, D)
    ref_out, ref_attn = _reference(x, mask, params, H)

    out, attn_w = siglip2_attention(x, mask, params, num_heads=H, output_attentions=True)
    jax.block_until_ready((out, attn_w))
    assert jnp.allclose(out, ref_out, atol=1e-5, rtol=1e-5)
    assert jnp.allclose(attn_w, ref_attn, atol=1e-5, rtol=1e-5)

    # Fast path: mask=None (no mask DMA), approx reciprocal, bf16 exp, no attn output.
    ref_out_nm, _ = _reference(x, None, params, H)
    out2, attn2 = siglip2_attention(x, None, params, num_heads=H,
                                    output_attentions=False,
                                    approx_reciprocal=True,
                                    softmax_exp_dtype=jnp.bfloat16)
    jax.block_until_ready(out2)
    assert attn2 is None
    assert jnp.allclose(out2, ref_out_nm, atol=2e-2, rtol=2e-2)

    # bf16 activations/weights stay bf16 on the MXU (f32 accumulation).
    to_bf16 = lambda t: t.astype(jnp.bfloat16)
    xb = to_bf16(x)
    params_b = tuple(to_bf16(p) for p in params)
    out_b, attn_b = siglip2_attention(xb, mask, params_b, num_heads=H, output_attentions=True)
    jax.block_until_ready((out_b, attn_b))
    ref_out_b, ref_attn_b = _reference(xb, mask, params_b, H)
    assert jnp.allclose(out_b.astype(jnp.float32), ref_out_b.astype(jnp.float32),
                        atol=3e-2, rtol=3e-2)
    assert jnp.allclose(attn_b.astype(jnp.float32), ref_attn_b.astype(jnp.float32),
                        atol=3e-2, rtol=3e-2)

    # --- Case 2: exercises q-tiling (tq < T) and multi-group accumulation ------------
    B2, T2, D2, H2 = 1, 256, 64, 4
    x2, mask2, params2 = make_case(k2, B2, T2, D2)
    ref_out2, ref_attn2 = _reference(x2, mask2, params2, H2)
    out3, attn3 = siglip2_attention(x2, mask2, params2, num_heads=H2,
                                    output_attentions=True,
                                    heads_per_group=2, q_block_size=128)
    jax.block_until_ready((out3, attn3))
    assert jnp.allclose(out3, ref_out2, atol=1e-4, rtol=1e-4)
    assert jnp.allclose(attn3, ref_attn2, atol=1e-4, rtol=1e-4)

    print("KERNEL_OK")
</pallas_src>

<mosaic_0001>
module attributes {stable_mosaic.version = 11 : i64} {
  func.func @_attn_kernel(%arg0: i32, %arg1: i32, %arg2: i32, %arg3: memref<1x8x32xf32, #tpu.memory_space<vmem>>, %arg4: memref<1x1x8x8xf32, #tpu.memory_space<vmem>>, %arg5: memref<1x32x32xf32, #tpu.memory_space<vmem>>, %arg6: memref<1x1x32xf32, #tpu.memory_space<vmem>>, %arg7: memref<1x32x64xf32, #tpu.memory_space<vmem>>, %arg8: memref<1x1x64xf32, #tpu.memory_space<vmem>>, %arg9: memref<1x32x32xf32, #tpu.memory_space<vmem>>, %arg10: memref<1x32xf32, #tpu.memory_space<vmem>>, %arg11: memref<1x8x32xf32, #tpu.memory_space<vmem>>, %arg12: memref<1x4x8x8xf32, #tpu.memory_space<vmem>>, %arg13: memref<8x32xf32, #tpu.memory_space<vmem>>) attributes {dimension_semantics = [#tpu.dimension_semantics<parallel>, #tpu.dimension_semantics<parallel>, #tpu.dimension_semantics<arbitrary>], iteration_bounds = array<i64: 2, 1, 1>, scalar_prefetch = 0 : i64, scratch_operands = 1 : i64, tpu.core_type = #tpu.core_type<tc>, window_params = [{transform_indices = @transform_0, window_bounds = array<i64: 1, 8, 32>}, {transform_indices = @transform_1, window_bounds = array<i64: 1, 1, 8, 8>}, {pipeline_mode = #tpu.pipeline_mode<synchronous>, transform_indices = @transform_2, window_bounds = array<i64: 1, 32, 32>}, {pipeline_mode = #tpu.pipeline_mode<synchronous>, transform_indices = @transform_3, window_bounds = array<i64: 1, 1, 32>}, {pipeline_mode = #tpu.pipeline_mode<synchronous>, transform_indices = @transform_4, window_bounds = array<i64: 1, 32, 64>}, {pipeline_mode = #tpu.pipeline_mode<synchronous>, transform_indices = @transform_5, window_bounds = array<i64: 1, 1, 64>}, {pipeline_mode = #tpu.pipeline_mode<synchronous>, transform_indices = @transform_6, window_bounds = array<i64: 1, 32, 32>}, {pipeline_mode = #tpu.pipeline_mode<synchronous>, transform_indices = @transform_7, window_bounds = array<i64: 1, 32>}, {transform_indices = @transform_8, window_bounds = array<i64: 1, 8, 32>}, {transform_indices = @transform_9, window_bounds = array<i64: 1, 4, 8, 8>}]} {
    %c0 = arith.constant 0 : index
    %c0_0 = arith.constant 0 : index
    %c0_1 = arith.constant 0 : index
    %0 = vector.load %arg3[%c0, %c0_0, %c0_1] : memref<1x8x32xf32, #tpu.memory_space<vmem>>, vector<1x8x32xf32>
    %1 = vector.shape_cast %0 : vector<1x8x32xf32> to vector<8x32xf32>
    %2 = arith.index_cast %arg2 : i32 to index
    %c0_2 = arith.constant 0 : index
    %c0_3 = arith.constant 0 : index
    %3 = vector.load %arg5[%2, %c0_2, %c0_3] : memref<1x32x32xf32, #tpu.memory_space<vmem>>, vector<1x32x32xf32>
    %4 = vector.shape_cast %3 : vector<1x32x32xf32> to vector<32x32xf32>
    %5 = arith.index_cast %arg2 : i32 to index
    %c0_4 = arith.constant 0 : index
    %c0_5 = arith.constant 0 : index
    %6 = vector.load %arg6[%5, %c0_4, %c0_5] : memref<1x1x32xf32, #tpu.memory_space<vmem>>, vector<1x1x32xf32>
    %7 = vector.shape_cast %6 : vector<1x1x32xf32> to vector<1x32xf32>
    %8 = arith.index_cast %arg2 : i32 to index
    %c0_6 = arith.constant 0 : index
    %c0_7 = arith.constant 0 : index
    %9 = vector.load %arg7[%8, %c0_6, %c0_7] : memref<1x32x64xf32, #tpu.memory_space<vmem>>, vector<1x32x64xf32>
    %10 = vector.shape_cast %9 : vector<1x32x64xf32> to vector<32x64xf32>
    %11 = arith.index_cast %arg2 : i32 to index
    %c0_8 = arith.constant 0 : index
    %c0_9 = arith.constant 0 : index
    %12 = vector.load %arg8[%11, %c0_8, %c0_9] : memref<1x1x64xf32, #tpu.memory_space<vmem>>, vector<1x1x64xf32>
    %13 = vector.shape_cast %12 : vector<1x1x64xf32> to vector<1x64xf32>
    %14 = arith.index_cast %arg2 : i32 to index
    %c0_10 = arith.constant 0 : index
    %c0_11 = arith.constant 0 : index
    %15 = vector.load %arg9[%14, %c0_10, %c0_11] : memref<1x32x32xf32, #tpu.memory_space<vmem>>, vector<1x32x32xf32>
    %16 = vector.shape_cast %15 : vector<1x32x32xf32> to vector<32x32xf32>
    %cst = arith.constant dense<0.000000e+00> : vector<8x32xf32>
    %17 = tpu.matmul %1, %4, %cst {dimension_numbers = #tpu.dot_dimension_numbers<[1], [0], [0], [1], [0, 0, 1, 1], [], []>} : vector<8x32xf32>, vector<32x32xf32>, vector<8x32xf32> -> vector<8x32xf32>
    %18 = vector.broadcast %7 : vector<1x32xf32> to vector<8x32xf32>
    %19 = arith.addf %17, %18 : vector<8x32xf32>
    %cst_12 = arith.constant dense<0.000000e+00> : vector<8x64xf32>
    %20 = tpu.matmul %1, %10, %cst_12 {dimension_numbers = #tpu.dot_dimension_numbers<[1], [0], [0], [1], [0, 0, 1, 1], [], []>} : vector<8x32xf32>, vector<32x64xf32>, vector<8x64xf32> -> vector<8x64xf32>
    %21 = vector.broadcast %13 : vector<1x64xf32> to vector<8x64xf32>
    %22 = arith.addf %20, %21 : vector<8x64xf32>
    %23 = vector.extract_strided_slice %22 {offsets = [0, 0], sizes = [8, 32], strides = [1, 1]} : vector<8x64xf32> to vector<8x32xf32>
    %24 = vector.extract_strided_slice %22 {offsets = [0, 32], sizes = [8, 32], strides = [1, 1]} : vector<8x64xf32> to vector<8x32xf32>
    %c0_13 = arith.constant 0 : index
    %c0_14 = arith.constant 0 : index
    %c0_15 = arith.constant 0 : index
    %c0_16 = arith.constant 0 : index
    %25 = vector.load %arg4[%c0_13, %c0_14, %c0_15, %c0_16] : memref<1x1x8x8xf32, #tpu.memory_space<vmem>>, vector<1x1x8x8xf32>
    %26 = vector.shape_cast %25 : vector<1x1x8x8xf32> to vector<8x8xf32>
    %27 = vector.extract_strided_slice %19 {offsets = [0, 0], sizes = [8, 8], strides = [1, 1]} : vector<8x32xf32> to vector<8x8xf32>
    %28 = vector.extract_strided_slice %23 {offsets = [0, 0], sizes = [8, 8], strides = [1, 1]} : vector<8x32xf32> to vector<8x8xf32>
    %29 = vector.extract_strided_slice %24 {offsets = [0, 0], sizes = [8, 8], strides = [1, 1]} : vector<8x32xf32> to vector<8x8xf32>
    %cst_17 = arith.constant dense<0.000000e+00> : vector<8x8xf32>
    %30 = tpu.matmul %27, %28, %cst_17 {dimension_numbers = #tpu.dot_dimension_numbers<[1], [1], [0], [0], [0, 0, 1, 0], [], []>} : vector<8x8xf32>, vector<8x8xf32>, vector<8x8xf32> -> vector<8x8xf32>
    %31 = arith.addf %30, %26 : vector<8x8xf32>
    %cst_18 = arith.constant dense<0xFF800000> : vector<8xf32>
    %32 = vector.multi_reduction <maximumf>, %31, %cst_18 [1] : vector<8x8xf32> to vector<8xf32>
    %33 = vector.shape_cast %32 : vector<8xf32> to vector<8x1xf32>
    %34 = vector.broadcast %33 : vector<8x1xf32> to vector<8x8xf32>
    %35 = arith.subf %31, %34 : vector<8x8xf32>
    %36 = math.exp %35 : vector<8x8xf32>
    %cst_19 = arith.constant dense<0.000000e+00> : vector<8xf32>
    %37 = vector.multi_reduction <add>, %36, %cst_19 [1] : vector<8x8xf32> to vector<8xf32>
    %38 = vector.shape_cast %37 : vector<8xf32> to vector<8x1xf32>
    %39 = tpu.reciprocal %38 : vector<8x1xf32> -> vector<8x1xf32>
    %40 = vector.broadcast %39 : vector<8x1xf32> to vector<8x8xf32>
    %41 = arith.mulf %36, %40 : vector<8x8xf32>
    %c0_20 = arith.constant 0 : index
    %c0_21 = arith.constant 0 : index
    %c0_22 = arith.constant 0 : index
    %c0_23 = arith.constant 0 : index
    %42 = vector.load %arg12[%c0_20, %c0_21, %c0_22, %c0_23] : memref<1x4x8x8xf32, #tpu.memory_space<vmem>>, vector<1x1x8x8xf32>
    %43 = vector.shape_cast %42 : vector<1x1x8x8xf32> to vector<8x8xf32>
    %44 = vector.shape_cast %41 : vector<8x8xf32> to vector<1x1x8x8xf32>
    tpu.vector_store %arg12[%c0_20, %c0_21, %c0_22, %c0_23], %44 {strides = array<i32>} : memref<1x4x8x8xf32, #tpu.memory_space<vmem>>, vector<1x1x8x8xf32>,
    %cst_24 = arith.constant dense<0.000000e+00> : vector<8x8xf32>
    %45 = tpu.matmul %41, %29, %cst_24 {dimension_numbers = #tpu.dot_dimension_numbers<[1], [0], [0], [1], [0, 0, 1, 1], [], []>} : vector<8x8xf32>, vector<8x8xf32>, vector<8x8xf32> -> vector<8x8xf32>
    %46 = vector.extract_strided_slice %19 {offsets = [0, 8], sizes = [8, 8], strides = [1, 1]} : vector<8x32xf32> to vector<8x8xf32>
    %47 = vector.extract_strided_slice %23 {offsets = [0, 8], sizes = [8, 8], strides = [1, 1]} : vector<8x32xf32> to vector<8x8xf32>
    %48 = vector.extract_strided_slice %24 {offsets = [0, 8], sizes = [8, 8], strides = [1, 1]} : vector<8x32xf32> to vector<8x8xf32>
    %cst_25 = arith.constant dense<0.000000e+00> : vector<8x8xf32>
    %49 = tpu.matmul %46, %47, %cst_25 {dimension_numbers = #tpu.dot_dimension_numbers<[1], [1], [0], [0], [0, 0, 1, 0], [], []>} : vector<8x8xf32>, vector<8x8xf32>, vector<8x8xf32> -> vector<8x8xf32>
    %50 = arith.addf %49, %26 : vector<8x8xf32>
    %cst_26 = arith.constant dense<0xFF800000> : vector<8xf32>
    %51 = vector.multi_reduction <maximumf>, %50, %cst_26 [1] : vector<8x8xf32> to vector<8xf32>
    %52 = vector.shape_cast %51 : vector<8xf32> to vector<8x1xf32>
    %53 = vector.broadcast %52 : vector<8x1xf32> to vector<8x8xf32>
    %54 = arith.subf %50, %53 : vector<8x8xf32>
    %55 = math.exp %54 : vector<8x8xf32>
    %cst_27 = arith.constant dense<0.000000e+00> : vector<8xf32>
    %56 = vector.multi_reduction <add>, %55, %cst_27 [1] : vector<8x8xf32> to vector<8xf32>
    %57 = vector.shape_cast %56 : vector<8xf32> to vector<8x1xf32>
    %58 = tpu.reciprocal %57 : vector<8x1xf32> -> vector<8x1xf32>
    %59 = vector.broadcast %58 : vector<8x1xf32> to vector<8x8xf32>
    %60 = arith.mulf %55, %59 : vector<8x8xf32>
    %c0_28 = arith.constant 0 : index
    %c1 = arith.constant 1 : index
    %c0_29 = arith.constant 0 : index
    %c0_30 = arith.constant 0 : index
    %61 = vector.load %arg12[%c0_28, %c1, %c0_29, %c0_30] : memref<1x4x8x8xf32, #tpu.memory_space<vmem>>, vector<1x1x8x8xf32>
    %62 = vector.shape_cast %61 : vector<1x1x8x8xf32> to vector<8x8xf32>
    %63 = vector.shape_cast %60 : vector<8x8xf32> to vector<1x1x8x8xf32>
    tpu.vector_store %arg12[%c0_28, %c1, %c0_29, %c0_30], %63 {strides = array<i32>} : memref<1x4x8x8xf32, #tpu.memory_space<vmem>>, vector<1x1x8x8xf32>,
    %cst_31 = arith.constant dense<0.000000e+00> : vector<8x8xf32>
    %64 = tpu.matmul %60, %48, %cst_31 {dimension_numbers = #tpu.dot_dimension_numbers<[1], [0], [0], [1], [0, 0, 1, 1], [], []>} : vector<8x8xf32>, vector<8x8xf32>, vector<8x8xf32> -> vector<8x8xf32>
    %65 = vector.extract_strided_slice %19 {offsets = [0, 16], sizes = [8, 8], strides = [1, 1]} : vector<8x32xf32> to vector<8x8xf32>
    %66 = vector.extract_strided_slice %23 {offsets = [0, 16], sizes = [8, 8], strides = [1, 1]} : vector<8x32xf32> to vector<8x8xf32>
    %67 = vector.extract_strided_slice %24 {offsets = [0, 16], sizes = [8, 8], strides = [1, 1]} : vector<8x32xf32> to vector<8x8xf32>
    %cst_32 = arith.constant dense<0.000000e+00> : vector<8x8xf32>
    %68 = tpu.matmul %65, %66, %cst_32 {dimension_numbers = #tpu.dot_dimension_numbers<[1], [1], [0], [0], [0, 0, 1, 0], [], []>} : vector<8x8xf32>, vector<8x8xf32>, vector<8x8xf32> -> vector<8x8xf32>
    %69 = arith.addf %68, %26 : vector<8x8xf32>
    %cst_33 = arith.constant dense<0xFF800000> : vector<8xf32>
    %70 = vector.multi_reduction <maximumf>, %69, %cst_33 [1] : vector<8x8xf32> to vector<8xf32>
    %71 = vector.shape_cast %70 : vector<8xf32> to vector<8x1xf32>
    %72 = vector.broadcast %71 : vector<8x1xf32> to vector<8x8xf32>
    %73 = arith.subf %69, %72 : vector<8x8xf32>
    %74 = math.exp %73 : vector<8x8xf32>
    %cst_34 = arith.constant dense<0.000000e+00> : vector<8xf32>
    %75 = vector.multi_reduction <add>, %74, %cst_34 [1] : vector<8x8xf32> to vector<8xf32>
    %76 = vector.shape_cast %75 : vector<8xf32> to vector<8x1xf32>
    %77 = tpu.reciprocal %76 : vector<8x1xf32> -> vector<8x1xf32>
    %78 = vector.broadcast %77 : vector<8x1xf32> to vector<8x8xf32>
    %79 = arith.mulf %74, %78 : vector<8x8xf32>
    %c0_35 = arith.constant 0 : index
    %c2 = arith.constant 2 : index
    %c0_36 = arith.constant 0 : index
    %c0_37 = arith.constant 0 : index
    %80 = vector.load %arg12[%c0_35, %c2, %c0_36, %c0_37] : memref<1x4x8x8xf32, #tpu.memory_space<vmem>>, vector<1x1x8x8xf32>
    %81 = vector.shape_cast %80 : vector<1x1x8x8xf32> to vector<8x8xf32>
    %82 = vector.shape_cast %79 : vector<8x8xf32> to vector<1x1x8x8xf32>
    tpu.vector_store %arg12[%c0_35, %c2, %c0_36, %c0_37], %82 {strides = array<i32>} : memref<1x4x8x8xf32, #tpu.memory_space<vmem>>, vector<1x1x8x8xf32>,
    %cst_38 = arith.constant dense<0.000000e+00> : vector<8x8xf32>
    %83 = tpu.matmul %79, %67, %cst_38 {dimension_numbers = #tpu.dot_dimension_numbers<[1], [0], [0], [1], [0, 0, 1, 1], [], []>} : vector<8x8xf32>, vector<8x8xf32>, vector<8x8xf32> -> vector<8x8xf32>
    %84 = vector.extract_strided_slice %19 {offsets = [0, 24], sizes = [8, 8], strides = [1, 1]} : vector<8x32xf32> to vector<8x8xf32>
    %85 = vector.extract_strided_slice %23 {offsets = [0, 24], sizes = [8, 8], strides = [1, 1]} : vector<8x32xf32> to vector<8x8xf32>
    %86 = vector.extract_strided_slice %24 {offsets = [0, 24], sizes = [8, 8], strides = [1, 1]} : vector<8x32xf32> to vector<8x8xf32>
    %cst_39 = arith.constant dense<0.000000e+00> : vector<8x8xf32>
    %87 = tpu.matmul %84, %85, %cst_39 {dimension_numbers = #tpu.dot_dimension_numbers<[1], [1], [0], [0], [0, 0, 1, 0], [], []>} : vector<8x8xf32>, vector<8x8xf32>, vector<8x8xf32> -> vector<8x8xf32>
    %88 = arith.addf %87, %26 : vector<8x8xf32>
    %cst_40 = arith.constant dense<0xFF800000> : vector<8xf32>
    %89 = vector.multi_reduction <maximumf>, %88, %cst_40 [1] : vector<8x8xf32> to vector<8xf32>
    %90 = vector.shape_cast %89 : vector<8xf32> to vector<8x1xf32>
    %91 = vector.broadcast %90 : vector<8x1xf32> to vector<8x8xf32>
    %92 = arith.subf %88, %91 : vector<8x8xf32>
    %93 = math.exp %92 : vector<8x8xf32>
    %cst_41 = arith.constant dense<0.000000e+00> : vector<8xf32>
    %94 = vector.multi_reduction <add>, %93, %cst_41 [1] : vector<8x8xf32> to vector<8xf32>
    %95 = vector.shape_cast %94 : vector<8xf32> to vector<8x1xf32>
    %96 = tpu.reciprocal %95 : vector<8x1xf32> -> vector<8x1xf32>
    %97 = vector.broadcast %96 : vector<8x1xf32> to vector<8x8xf32>
    %98 = arith.mulf %93, %97 : vector<8x8xf32>
    %c0_42 = arith.constant 0 : index
    %c3 = arith.constant 3 : index
    %c0_43 = arith.constant 0 : index
    %c0_44 = arith.constant 0 : index
    %99 = vector.load %arg12[%c0_42, %c3, %c0_43, %c0_44] : memref<1x4x8x8xf32, #tpu.memory_space<vmem>>, vector<1x1x8x8xf32>
    %100 = vector.shape_cast %99 : vector<1x1x8x8xf32> to vector<8x8xf32>
    %101 = vector.shape_cast %98 : vector<8x8xf32> to vector<1x1x8x8xf32>
    tpu.vector_store %arg12[%c0_42, %c3, %c0_43, %c0_44], %101 {strides = array<i32>} : memref<1x4x8x8xf32, #tpu.memory_space<vmem>>, vector<1x1x8x8xf32>,
    %cst_45 = arith.constant dense<0.000000e+00> : vector<8x8xf32>
    %102 = tpu.matmul %98, %86, %cst_45 {dimension_numbers = #tpu.dot_dimension_numbers<[1], [0], [0], [1], [0, 0, 1, 1], [], []>} : vector<8x8xf32>, vector<8x8xf32>, vector<8x8xf32> -> vector<8x8xf32>
    %103 = tpu.concatenate %45, %64, %83, %102 in 1 : vector<8x8xf32>, vector<8x8xf32>, vector<8x8xf32>, vector<8x8xf32> -> vector<8x32xf32>
    %cst_46 = arith.constant dense<0.000000e+00> : vector<8x32xf32>
    %104 = tpu.matmul %103, %16, %cst_46 {dimension_numbers = #tpu.dot_dimension_numbers<[1], [0], [0], [1], [0, 0, 1, 1], [], []>} : vector<8x32xf32>, vector<32x32xf32>, vector<8x32xf32> -> vector<8x32xf32>
    %c0_i32 = arith.constant 0 : i32
    %105 = arith.cmpi eq, %arg2, %c0_i32 : i32
    %106 = arith.extui %105 : i1 to i32
    %c0_i32_47 = arith.constant 0 : i32
    %107 = arith.cmpi ne, %106, %c0_i32_47 : i32
    scf.if %107 {
      %c0_54 = arith.constant 0 : index
      %c0_55 = arith.constant 0 : index
      %114 = vector.load %arg10[%c0_54, %c0_55] : memref<1x32xf32, #tpu.memory_space<vmem>>, vector<1x32xf32>
      %115 = vector.shape_cast %114 : vector<1x32xf32> to vector<1x32xf32>
      %116 = vector.broadcast %115 : vector<1x32xf32> to vector<8x32xf32>
      %c0_56 = arith.constant 0 : index
      %c0_57 = arith.constant 0 : index
      %117 = vector.load %arg13[%c0_56, %c0_57] : memref<8x32xf32, #tpu.memory_space<vmem>>, vector<8x32xf32>
      tpu.vector_store %arg13[%c0_56, %c0_57], %116 {strides = array<i32>} : memref<8x32xf32, #tpu.memory_space<vmem>>, vector<8x32xf32>,
    } else {
    }
    %c0_48 = arith.constant 0 : index
    %c0_49 = arith.constant 0 : index
    %108 = vector.load %arg13[%c0_48, %c0_49] : memref<8x32xf32, #tpu.memory_space<vmem>>, vector<8x32xf32>
    %109 = arith.addf %108, %104 : vector<8x32xf32>
    %c0_50 = arith.constant 0 : index
    %c0_51 = arith.constant 0 : index
    %110 = vector.load %arg13[%c0_50, %c0_51] : memref<8x32xf32, #tpu.memory_space<vmem>>, vector<8x32xf32>
    tpu.vector_store %arg13[%c0_50, %c0_51], %109 {strides = array<i32>} : memref<8x32xf32, #tpu.memory_space<vmem>>, vector<8x32xf32>,
    %c0_i32_52 = arith.constant 0 : i32
    %111 = arith.cmpi eq, %arg2, %c0_i32_52 : i32
    %112 = arith.extui %111 : i1 to i32
    %c0_i32_53 = arith.constant 0 : i32
    %113 = arith.cmpi ne, %112, %c0_i32_53 : i32
    scf.if %113 {
      %c0_54 = arith.constant 0 : index
      %c0_55 = arith.constant 0 : index
      %114 = vector.load %arg13[%c0_54, %c0_55] : memref<8x32xf32, #tpu.memory_space<vmem>>, vector<8x32xf32>
      %c0_56 = arith.constant 0 : index
      %c0_57 = arith.constant 0 : index
      %c0_58 = arith.constant 0 : index
      %115 = vector.load %arg11[%c0_56, %c0_57, %c0_58] : memref<1x8x32xf32, #tpu.memory_space<vmem>>, vector<1x8x32xf32>
      %116 = vector.shape_cast %115 : vector<1x8x32xf32> to vector<8x32xf32>
      %117 = vector.shape_cast %114 : vector<8x32xf32> to vector<1x8x32xf32>
      tpu.vector_store %arg11[%c0_56, %c0_57, %c0_58], %117 {strides = array<i32>} : memref<1x8x32xf32, #tpu.memory_space<vmem>>, vector<1x8x32xf32>,
    } else {
    }
    return
  }
  func.func @transform_0(%arg0: i32, %arg1: i32, %arg2: i32) -> (i32, i32, i32) {
    %c0_i32 = arith.constant 0 : i32
    %c0_i32_0 = arith.constant 0 : i32
    %c0_i32_1 = arith.constant 0 : i32
    return %arg0, %c0_i32, %c0_i32_0 : i32, i32, i32
  }
  func.func @transform_1(%arg0: i32, %arg1: i32, %arg2: i32) -> (i32, i32, i32, i32) {
    %c0_i32 = arith.constant 0 : i32
    %c0_i32_0 = arith.constant 0 : i32
    %c0_i32_1 = arith.constant 0 : i32
    return %arg0, %c0_i32, %arg1, %c0_i32_0 : i32, i32, i32, i32
  }
  func.func @transform_2(%arg0: i32, %arg1: i32, %arg2: i32) -> (i32, i32, i32) {
    %c0_i32 = arith.constant 0 : i32
    %c0_i32_0 = arith.constant 0 : i32
    %c0_i32_1 = arith.constant 0 : i32
    %c0_i32_2 = arith.constant 0 : i32
    return %c0_i32, %c0_i32_0, %c0_i32_1 : i32, i32, i32
  }
  func.func @transform_3(%arg0: i32, %arg1: i32, %arg2: i32) -> (i32, i32, i32) {
    %c0_i32 = arith.constant 0 : i32
    %c0_i32_0 = arith.constant 0 : i32
    %c0_i32_1 = arith.constant 0 : i32
    %c0_i32_2 = arith.constant 0 : i32
    return %c0_i32, %c0_i32_0, %c0_i32_1 : i32, i32, i32
  }
  func.func @transform_4(%arg0: i32, %arg1: i32, %arg2: i32) -> (i32, i32, i32) {
    %c0_i32 = arith.constant 0 : i32
    %c0_i32_0 = arith.constant 0 : i32
    %c0_i32_1 = arith.constant 0 : i32
    %c0_i32_2 = arith.constant 0 : i32
    return %c0_i32, %c0_i32_0, %c0_i32_1 : i32, i32, i32
  }
  func.func @transform_5(%arg0: i32, %arg1: i32, %arg2: i32) -> (i32, i32, i32) {
    %c0_i32 = arith.constant 0 : i32
    %c0_i32_0 = arith.constant 0 : i32
    %c0_i32_1 = arith.constant 0 : i32
    %c0_i32_2 = arith.constant 0 : i32
    return %c0_i32, %c0_i32_0, %c0_i32_1 : i32, i32, i32
  }
  func.func @transform_6(%arg0: i32, %arg1: i32, %arg2: i32) -> (i32, i32, i32) {
    %c0_i32 = arith.constant 0 : i32
    %c0_i32_0 = arith.constant 0 : i32
    %c0_i32_1 = arith.constant 0 : i32
    %c0_i32_2 = arith.constant 0 : i32
    return %c0_i32, %c0_i32_0, %c0_i32_1 : i32, i32, i32
  }
  func.func @transform_7(%arg0: i32, %arg1: i32, %arg2: i32) -> (i32, i32) {
    %c0_i32 = arith.constant 0 : i32
    %c0_i32_0 = arith.constant 0 : i32
    %c0_i32_1 = arith.constant 0 : i32
    return %c0_i32, %c0_i32_0 : i32, i32
  }
  func.func @transform_8(%arg0: i32, %arg1: i32, %arg2: i32) -> (i32, i32, i32) {
    %c0_i32 = arith.constant 0 : i32
    %c0_i32_0 = arith.constant 0 : i32
    return %arg0, %arg1, %c0_i32 : i32, i32, i32
  }
  func.func @transform_9(%arg0: i32, %arg1: i32, %arg2: i32) -> (i32, i32, i32, i32) {
    %c0_i32 = arith.constant 0 : i32
    %c0_i32_0 = arith.constant 0 : i32
    return %arg0, %arg2, %arg1, %c0_i32 : i32, i32, i32, i32
  }
}

</mosaic_0001>

<llo_original>
// kernel: tpu_custom_call.1
$region0: #{tpu_custom_call.1}
  #allocation0 [shape = 'u32[]', space=smem, size = 0x4, offset = 0x4, fixed_abs, tag = 'smem constant byte address 0x4 - core index']
  #allocation1 [shape = 'u32[72,128]{1,0:T(1,128)}', space=vmem, size = 0x9000, scoped, tag = 'internal scratch']
  #allocation2 [shape = 'f32[8,32]{1,0:T(8,128)}', space=vmem, size = 0x1000, scoped, tag = 'scratch operand']
  %s0 = inlined_call_operand.hbm [shape: f32[2,8,32], index: 0, kind: input, shape index: {}]
  %s1 = inlined_call_operand.hbm [shape: f32[2,1,8,8], index: 1, kind: input, shape index: {}]
  %s2 = inlined_call_operand.hbm [shape: f32[1,32,32], index: 2, kind: input, shape index: {}]
  %s3 = inlined_call_operand.vmem [shape: f32[1,1,32], index: 3, kind: input, shape index: {}]
  %s4 = inlined_call_operand.hbm [shape: f32[1,32,64], index: 4, kind: input, shape index: {}]
  %s5 = inlined_call_operand.vmem [shape: f32[1,1,64], index: 5, kind: input, shape index: {}]
  %s6 = inlined_call_operand.hbm [shape: f32[1,32,32], index: 6, kind: input, shape index: {}]
  %s7 = inlined_call_operand.vmem [shape: f32[1,32], index: 7, kind: input, shape index: {}]
  %s8 = inlined_call_operand.hbm [shape: f32[2,8,32], index: 8, kind: output, shape index: {0}]
  %s9 = inlined_call_operand.hbm [shape: f32[2,4,8,8], index: 9, kind: output, shape index: {1}]
  %10 = xla_tuple %s8, %s9
  %s11 = sld [smem:[#allocation0]]
  $region101: #{tpu_custom_call.1} parent=0
    _
  %s13 = ssub.s32 1, %s11
  %s14 = scalar_select 0, %s13, %s11
  $region1: #{tpu_custom_call.1} parent=0
    #allocation3 [shape = 'u8[8192]{0}', space=vmem, size = 0x2000, scoped, tag = 'input window, operand 0']
    #allocation4 [shape = 's32[2]{0}', space=sflag, size = 0x8, scoped, tag = 'scoped memory for tpu_custom_call.1']
    #allocation5 [shape = 's32[2]{0}', space=sflag, size = 0x8, scoped, tag = 'scoped memory for tpu_custom_call.1']
    #allocation6 [shape = 'u8[8192]{0}', space=vmem, size = 0x2000, scoped, tag = 'input window, operand 1']
    #allocation7 [shape = 's32[2]{0}', space=sflag, size = 0x8, scoped, tag = 'scoped memory for tpu_custom_call.1']
    #allocation8 [shape = 'u8[16384]{0}', space=vmem, size = 0x4000, scoped, tag = 'input window, operand 2, single buffered']
    #allocation9 [shape = 'u8[16384]{0}', space=vmem, size = 0x4000, scoped, tag = 'input window, operand 4, single buffered']
    #allocation10 [shape = 's32[1]{0}', space=sflag, size = 0x4, scoped, tag = 'scoped memory for tpu_custom_call.1']
    #allocation11 [shape = 'u8[16384]{0}', space=vmem, size = 0x4000, scoped, tag = 'input window, operand 6, single buffered']
    #allocation12 [shape = 'u8[8192]{0}', space=vmem, size = 0x2000, scoped, tag = 'output window, operand 0']
    #allocation13 [shape = 'u8[32768]{0}', space=vmem, size = 0x8000, scoped, tag = 'output window, operand 1']
    #allocation14 [shape = 's32[2]{0}', space=sflag, size = 0x8, scoped, tag = 'scoped memory for tpu_custom_call.1']
    %15 = vsyncpa [#allocation4], 0
    %s16 = scalar_lea.sflag [#allocation4], 1
    %17 = vsyncpa %s16, 0
    %18 = vsyncpa [#allocation7], 0
    %s19 = scalar_lea.sflag [#allocation7], 1
    %20 = vsyncpa %s19, 0
    %21 = vsyncpa [#allocation10], 0
    %22 = vsyncpa [#allocation5], 0
    %s23 = scalar_lea.sflag [#allocation5], 1
    %24 = vsyncpa %s23, 0
    %25 = vsyncpa [#allocation14], 0
    %s26 = scalar_lea.sflag [#allocation14], 1
    %27 = vsyncpa %s26, 0
    loop: start=0, step=1, limit=4
    $region2: #{tpu_custom_call.1} parent=1 // loop_pre_header
      _
    $region3: #{tpu_custom_call.1} parent=1 // loop_header
      %s29 = sphi 0, %s33
      %p30 = scmp.ge.s32.totalorder %s29, 4
      %s36 = sphi 0, %s55
      %s37 = sphi 0, %s51
      %s38 = sphi 0, %s47
      %s39 = sphi 0, %s36
      %s40 = sphi 0, %s37
      %s41 = sphi 0, %s38
      %s42 = sphi 0, %s39
      %s43 = sphi 0, %s40
      %s44 = sphi 0, %s41
      %s58 = sphi 0, %s60
      %s61 = sphi 0, %s58
      %s62 = sphi 0, %s61
      %s78 = sphi 0, %s62
      %s86 = sphi 0, %s88
      %s89 = sphi 0, %s86
      %s90 = sphi 0, %s89
      %s106 = sphi 0, %s90
      %s110 = sphi 0, %s110
      %s112 = sphi 0, %s110
      %s113 = sphi 0, %s112
      %s127 = sphi 0, %s113
      %s131 = sphi 0, %s131
      %s133 = sphi 0, %s131
      %s134 = sphi 0, %s133
      %s148 = sphi 0, %s134
      %s152 = sphi 0, %s152
      %s154 = sphi 0, %s152
      %s155 = sphi 0, %s154
      %s169 = sphi 0, %s155
      %s173 = sphi 0, %s173
      %s175 = sphi 0, %s173
      %s176 = sphi 0, %s175
      %s190 = sphi 0, %s176
      %s194 = sphi 0, %s194
      %s196 = sphi 0, %s194
      %s197 = sphi 0, %s196
      %s211 = sphi 0, %s197
      %s215 = sphi 0, %s215
      %s217 = sphi 0, %s215
      %s218 = sphi 0, %s217
      %s232 = sphi 0, %s218
      %s240 = sphi 0, %s242
      %s243 = sphi 0, %s240
      %s244 = sphi 0, %s243
      %s260 = sphi 0, %s244
      %s270 = sphi 0, %s272
      %s273 = sphi 0, %s270
      %s274 = sphi 0, %s273
      %s290 = sphi 0, %s274
    $region4: #{tpu_custom_call.1} parent=1 // loop_header_branch
      %32 = sbr.rel (%p30) target = $region8
    $region5: #{tpu_custom_call.1} parent=1 // loop_body
      %s34 = ssub.s32 %s29, 1
      %s35 = ssub.s32 %s29, 2
      %s45 = sadd.s32 1, %s38
      %p46 = scmp.ge.s32.totalorder %s45, 1
      %s47 = scalar_select %p46, 0, %s45
      %s48 = sadd.s32 1, %s37
      %s49 = scalar_select %p46, %s48, %s37
      %p50 = scmp.ge.s32.totalorder %s49, 1
      %s51 = scalar_select %p50, 0, %s49
      %s52 = sadd.s32 1, %s36
      %s53 = scalar_select %p50, %s52, %s36
      %p54 = scmp.ge.s32.totalorder %s53, 2
      %s55 = scalar_select %p54, 0, %s53
      %s56 = ssub.s32 %s36, %s55
      %p57 = scmp.eq.s32.totalorder %s56, 0
      %s59 = sadd.s32 %s58, 1
      %s60 = scalar_select %p57, %s58, %s59
      %p63 = pneg %p57
      %p64 = scmp.eq.s32.totalorder %s29, 1
      %p65 = por %p63, %p64
      %p66 = scmp.ne.s32.totalorder %s58, %s61
      %p67 = scmp.eq.s32.totalorder %s29, 0
      %p68 = por %p66, %p67
      %p69 = scmp.ne.s32.totalorder %s58, %s61
      %p70 = scmp.eq.s32.totalorder %s34, 1
      %p71 = por %p69, %p70
      %p72 = scmp.ne.s32.totalorder %s61, %s62
      %p73 = scmp.eq.s32.totalorder %s34, 0
      %p74 = por %p72, %p73
      %p75 = scmp.ne.s32.totalorder %s61, %s62
      %p76 = scmp.eq.s32.totalorder %s35, 1
      %p77 = por %p75, %p76
      %p79 = scmp.ne.s32.totalorder %s62, %s78
      %p80 = scmp.eq.s32.totalorder %s35, 0
      %p81 = por %p79, %p80
      %s82 = ssub.s32 %s36, %s55
      %s83 = ssub.s32 %s37, %s51
      %s84 = sor.u32 %s82, %s83
      %p85 = scmp.eq.s32.totalorder %s84, 0
      %s87 = sadd.s32 %s86, 1
      %s88 = scalar_select %p85, %s86, %s87
      %p91 = pneg %p85
      %p92 = scmp.eq.s32.totalorder %s29, 1
      %p93 = por %p91, %p92
      %p94 = scmp.ne.s32.totalorder %s86, %s89
      %p95 = scmp.eq.s32.totalorder %s29, 0
      %p96 = por %p94, %p95
      %p97 = scmp.ne.s32.totalorder %s86, %s89
      %p98 = scmp.eq.s32.totalorder %s34, 1
      %p99 = por %p97, %p98
      %p100 = scmp.ne.s32.totalorder %s89, %s90
      %p101 = scmp.eq.s32.totalorder %s34, 0
      %p102 = por %p100, %p101
      %p103 = scmp.ne.s32.totalorder %s89, %s90
      %p104 = scmp.eq.s32.totalorder %s35, 1
      %p105 = por %p103, %p104
      %p107 = scmp.ne.s32.totalorder %s90, %s106
      %p108 = scmp.eq.s32.totalorder %s35, 0
      %p109 = por %p107, %p108
      %s111 = sadd.s32 %s110, 1
      %p114 = scmp.eq.s32.totalorder %s29, 1
      %p115 = scmp.ne.s32.totalorder %s110, %s112
      %p116 = scmp.eq.s32.totalorder %s29, 0
      %p117 = por %p115, %p116
      %p118 = scmp.ne.s32.totalorder %s110, %s112
      %p119 = scmp.eq.s32.totalorder %s34, 1
      %p120 = por %p118, %p119
      %p121 = scmp.ne.s32.totalorder %s112, %s113
      %p122 = scmp.eq.s32.totalorder %s34, 0
      %p123 = por %p121, %p122
      %p124 = scmp.ne.s32.totalorder %s112, %s113
      %p125 = scmp.eq.s32.totalorder %s35, 1
      %p126 = por %p124, %p125
      %p128 = scmp.ne.s32.totalorder %s113, %s127
      %p129 = scmp.eq.s32.totalorder %s35, 0
      %p130 = por %p128, %p129
      %s132 = sadd.s32 %s131, 1
      %p135 = scmp.eq.s32.totalorder %s29, 1
      %p136 = scmp.ne.s32.totalorder %s131, %s133
      %p137 = scmp.eq.s32.totalorder %s29, 0
      %p138 = por %p136, %p137
      %p139 = scmp.ne.s32.totalorder %s131, %s133
      %p140 = scmp.eq.s32.totalorder %s34, 1
      %p141 = por %p139, %p140
      %p142 = scmp.ne.s32.totalorder %s133, %s134
      %p143 = scmp.eq.s32.totalorder %s34, 0
      %p144 = por %p142, %p143
      %p145 = scmp.ne.s32.totalorder %s133, %s134
      %p146 = scmp.eq.s32.totalorder %s35, 1
      %p147 = por %p145, %p146
      %p149 = scmp.ne.s32.totalorder %s134, %s148
      %p150 = scmp.eq.s32.totalorder %s35, 0
      %p151 = por %p149, %p150
      %s153 = sadd.s32 %s152, 1
      %p156 = scmp.eq.s32.totalorder %s29, 1
      %p157 = scmp.ne.s32.totalorder %s152, %s154
      %p158 = scmp.eq.s32.totalorder %s29, 0
      %p159 = por %p157, %p158
      %p160 = scmp.ne.s32.totalorder %s152, %s154
      %p161 = scmp.eq.s32.totalorder %s34, 1
      %p162 = por %p160, %p161
      %p163 = scmp.ne.s32.totalorder %s154, %s155
      %p164 = scmp.eq.s32.totalorder %s34, 0
      %p165 = por %p163, %p164
      %p166 = scmp.ne.s32.totalorder %s154, %s155
      %p167 = scmp.eq.s32.totalorder %s35, 1
      %p168 = por %p166, %p167
      %p170 = scmp.ne.s32.totalorder %s155, %s169
      %p171 = scmp.eq.s32.totalorder %s35, 0
      %p172 = por %p170, %p171
      %s174 = sadd.s32 %s173, 1
      %p177 = scmp.eq.s32.totalorder %s29, 1
      %p178 = scmp.ne.s32.totalorder %s173, %s175
      %p179 = scmp.eq.s32.totalorder %s29, 0
      %p180 = por %p178, %p179
      %p181 = scmp.ne.s32.totalorder %s173, %s175
      %p182 = scmp.eq.s32.totalorder %s34, 1
      %p183 = por %p181, %p182
      %p184 = scmp.ne.s32.totalorder %s175, %s176
      %p185 = scmp.eq.s32.totalorder %s34, 0
      %p186 = por %p184, %p185
      %p187 = scmp.ne.s32.totalorder %s175, %s176
      %p188 = scmp.eq.s32.totalorder %s35, 1
      %p189 = por %p187, %p188
      %p191 = scmp.ne.s32.totalorder %s176, %s190
      %p192 = scmp.eq.s32.totalorder %s35, 0
      %p193 = por %p191, %p192
      %s195 = sadd.s32 %s194, 1
      %p198 = scmp.eq.s32.totalorder %s29, 1
      %p199 = scmp.ne.s32.totalorder %s194, %s196
      %p200 = scmp.eq.s32.totalorder %s29, 0
      %p201 = por %p199, %p200
      %p202 = scmp.ne.s32.totalorder %s194, %s196
      %p203 = scmp.eq.s32.totalorder %s34, 1
      %p204 = por %p202, %p203
      %p205 = scmp.ne.s32.totalorder %s196, %s197
      %p206 = scmp.eq.s32.totalorder %s34, 0
      %p207 = por %p205, %p206
      %p208 = scmp.ne.s32.totalorder %s196, %s197
      %p209 = scmp.eq.s32.totalorder %s35, 1
      %p210 = por %p208, %p209
      %p212 = scmp.ne.s32.totalorder %s197, %s211
      %p213 = scmp.eq.s32.totalorder %s35, 0
      %p214 = por %p212, %p213
      %s216 = sadd.s32 %s215, 1
      %p219 = scmp.eq.s32.totalorder %s29, 1
      %p220 = scmp.ne.s32.totalorder %s215, %s217
      %p221 = scmp.eq.s32.totalorder %s29, 0
      %p222 = por %p220, %p221
      %p223 = scmp.ne.s32.totalorder %s215, %s217
      %p224 = scmp.eq.s32.totalorder %s34, 1
      %p225 = por %p223, %p224
      %p226 = scmp.ne.s32.totalorder %s217, %s218
      %p227 = scmp.eq.s32.totalorder %s34, 0
      %p228 = por %p226, %p227
      %p229 = scmp.ne.s32.totalorder %s217, %s218
      %p230 = scmp.eq.s32.totalorder %s35, 1
      %p231 = por %p229, %p230
      %p233 = scmp.ne.s32.totalorder %s218, %s232
      %p234 = scmp.eq.s32.totalorder %s35, 0
      %p235 = por %p233, %p234
      %s236 = ssub.s32 %s36, %s55
      %s237 = ssub.s32 %s37, %s51
      %s238 = sor.u32 %s236, %s237
      %p239 = scmp.eq.s32.totalorder %s238, 0
      %s241 = sadd.s32 %s240, 1
      %s242 = scalar_select %p239, %s240, %s241
      %p245 = pneg %p239
      %p246 = scmp.eq.s32.totalorder %s29, 1
      %p247 = por %p245, %p246
      %p248 = scmp.ne.s32.totalorder %s240, %s243
      %p249 = scmp.eq.s32.totalorder %s29, 0
      %p250 = por %p248, %p249
      %p251 = scmp.ne.s32.totalorder %s240, %s243
      %p252 = scmp.eq.s32.totalorder %s34, 1
      %p253 = por %p251, %p252
      %p254 = scmp.ne.s32.totalorder %s243, %s244
      %p255 = scmp.eq.s32.totalorder %s34, 0
      %p256 = por %p254, %p255
      %p257 = scmp.ne.s32.totalorder %s243, %s244
      %p258 = scmp.eq.s32.totalorder %s35, 1
      %p259 = por %p257, %p258
      %p261 = scmp.ne.s32.totalorder %s244, %s260
      %p262 = scmp.eq.s32.totalorder %s35, 0
      %p263 = por %p261, %p262
      %s264 = ssub.s32 %s36, %s55
      %s265 = ssub.s32 %s38, %s47
      %s266 = sor.u32 %s264, %s265
      %s267 = ssub.s32 %s37, %s51
      %s268 = sor.u32 %s266, %s267
      %p269 = scmp.eq.s32.totalorder %s268, 0
      %s271 = sadd.s32 %s270, 1
      %s272 = scalar_select %p269, %s270, %s271
      %p275 = pneg %p269
      %p276 = scmp.eq.s32.totalorder %s29, 1
      %p277 = por %p275, %p276
      %p278 = scmp.ne.s32.totalorder %s270, %s273
      %p279 = scmp.eq.s32.totalorder %s29, 0
      %p280 = por %p278, %p279
      %p281 = scmp.ne.s32.totalorder %s270, %s273
      %p282 = scmp.eq.s32.totalorder %s34, 1
      %p283 = por %p281, %p282
      %p284 = scmp.ne.s32.totalorder %s273, %s274
      %p285 = scmp.eq.s32.totalorder %s34, 0
      %p286 = por %p284, %p285
      %p287 = scmp.ne.s32.totalorder %s273, %s274
      %p288 = scmp.eq.s32.totalorder %s35, 1
      %p289 = por %p287, %p288
      %p291 = scmp.ne.s32.totalorder %s274, %s290
      %p292 = scmp.eq.s32.totalorder %s35, 0
      %p293 = por %p291, %p292
      %p294 = scmp.le.s32.totalorder 1, %s29
      %p295 = scmp.lt.s32.totalorder %s29, 3
      %p296 = pnand %p294, %p295
      %p297 = pneg %p296
      // Predicated region
      $region9: #{tpu_custom_call.1} parent=5 // pred_check
        _
      $region10: #{tpu_custom_call.1} parent=5 // pred_check_branch
        %299 = sbr.rel (%p296) target = $region12
      $region11: #{tpu_custom_call.1} parent=5 // pred_region
        %s300 = ssub.s32 %s29, 1
        // Predicated region
        $region13: #{tpu_custom_call.1} parent=11 // pred_check
          %p301 = pneg %p123
        $region14: #{tpu_custom_call.1} parent=11 // pred_check_branch
          %303 = sbr.rel (%p301) target = $region16
        $region15: #{tpu_custom_call.1} parent=11 // pred_region
          %305 = vsyncadd [#allocation7], 0
          %s306 = sshll.u32 %s2, 4
          %s307 = int_to_ptr.hbm [resolvable:$true] %s306
          %s308 = sshll.u32 [#allocation8], 4
          %s309 = int_to_ptr.vmem [resolvable:$true] %s308
          %314 = dma.hbm_to_vmem [thread:$0]  %s307, 512, %s309, [#allocation7], 128, 128, 8
        $region16: #{tpu_custom_call.1} parent=11 // pred_fallthru
          _
        // Predicated region
        $region17: #{tpu_custom_call.1} parent=11 // pred_check
          %p315 = pneg %p144
        $region18: #{tpu_custom_call.1} parent=11 // pred_check_branch
          %317 = sbr.rel (%p315) target = $region20
        $region19: #{tpu_custom_call.1} parent=11 // pred_region
          _
        $region20: #{tpu_custom_call.1} parent=11 // pred_fallthru
          _
        // Predicated region
        $region21: #{tpu_custom_call.1} parent=11 // pred_check
          %p318 = pneg %p165
        $region22: #{tpu_custom_call.1} parent=11 // pred_check_branch
          %320 = sbr.rel (%p318) target = $region24
        $region23: #{tpu_custom_call.1} parent=11 // pred_region
          %322 = vsyncadd [#allocation10], 0
          %s323 = sshll.u32 %s4, 4
          %s324 = int_to_ptr.hbm [resolvable:$true] %s323
          %s325 = sshll.u32 [#allocation9], 4
          %s326 = int_to_ptr.vmem [resolvable:$true] %s325
          %331 = dma.hbm_to_vmem [thread:$0]  %s324, 512, %s326, [#allocation10], 128, 128, 8
        $region24: #{tpu_custom_call.1} parent=11 // pred_fallthru
          _
        // Predicated region
        $region25: #{tpu_custom_call.1} parent=11 // pred_check
          %p332 = pneg %p186
        $region26: #{tpu_custom_call.1} parent=11 // pred_check_branch
          %334 = sbr.rel (%p332) target = $region28
        $region27: #{tpu_custom_call.1} parent=11 // pred_region
          _
        $region28: #{tpu_custom_call.1} parent=11 // pred_fallthru
          _
        // Predicated region
        $region29: #{tpu_custom_call.1} parent=11 // pred_check
          %p335 = pneg %p207
        $region30: #{tpu_custom_call.1} parent=11 // pred_check_branch
          %337 = sbr.rel (%p335) target = $region32
        $region31: #{tpu_custom_call.1} parent=11 // pred_region
          %339 = vsyncadd [#allocation10], 0
          %s340 = sshll.u32 %s6, 4
          %s341 = int_to_ptr.hbm [resolvable:$true] %s340
          %s342 = sshll.u32 [#allocation11], 4
          %s343 = int_to_ptr.vmem [resolvable:$true] %s342
          %348 = dma.hbm_to_vmem [thread:$0]  %s341, 512, %s343, [#allocation10], 128, 128, 8
        $region32: #{tpu_custom_call.1} parent=11 // pred_fallthru
          _
        // Predicated region
        $region33: #{tpu_custom_call.1} parent=11 // pred_check
          %p349 = pneg %p228
        $region34: #{tpu_custom_call.1} parent=11 // pred_check_branch
          %351 = sbr.rel (%p349) target = $region36
        $region35: #{tpu_custom_call.1} parent=11 // pred_region
          _
        $region36: #{tpu_custom_call.1} parent=11 // pred_fallthru
          _
      $region12: #{tpu_custom_call.1} parent=5 // pred_fallthru
        _
      %p352 = scmp.lt.s32.totalorder %s29, 2
      // Predicated region
      $region37: #{tpu_custom_call.1} parent=5 // pred_check
        %p353 = pneg %p352
      $region38: #{tpu_custom_call.1} parent=5 // pred_check_branch
        %355 = sbr.rel (%p353) target = $region40
      $region39: #{tpu_custom_call.1} parent=5 // pred_region
        // Predicated region
        $region41: #{tpu_custom_call.1} parent=39 // pred_check
          %p356 = pneg %p68
        $region42: #{tpu_custom_call.1} parent=39 // pred_check_branch
          %358 = sbr.rel (%p356) target = $region44
        $region43: #{tpu_custom_call.1} parent=39 // pred_region
          %s359 = sand.u32 %s58, 1
          %s360 = scalar_lea.sflag [#allocation4], %s359
          %s361 = sand.u32 %s58, 1
          %s362 = smul.addr %s361, 8
          %s363 = scalar_lea.vmem [#allocation3], %s362
          %365 = vsyncadd %s360, 0
          %s366 = smul.addr %s36, 8
          %s367 = scalar_lea.hbm %s0, %s366
          %s369 = sshll.u32 %s367, 4
          %s370 = int_to_ptr.hbm [resolvable:$true] %s369
          %s371 = sshll.u32 %s363, 4
          %s372 = int_to_ptr.vmem [resolvable:$true] %s371
          %374 = dma.hbm_to_vmem [thread:$0]  %s370, 128, %s372, %s360
        $region44: #{tpu_custom_call.1} parent=39 // pred_fallthru
          _
        // Predicated region
        $region45: #{tpu_custom_call.1} parent=39 // pred_check
          %p375 = pneg %p96
        $region46: #{tpu_custom_call.1} parent=39 // pred_check_branch
          %377 = sbr.rel (%p375) target = $region48
        $region47: #{tpu_custom_call.1} parent=39 // pred_region
          %s378 = sand.u32 %s29, 1
          %s379 = scalar_lea.sflag [#allocation7], %s378
          %s380 = sand.u32 %s86, 1
          %s381 = smul.addr %s380, 8
          %s382 = scalar_lea.vmem [#allocation6], %s381
          %384 = vsyncadd %s379, 0
          %s385 = sadd.s32 %s37, %s36
          %s386 = smul.addr %s385, 8
          %s387 = scalar_lea.hbm %s1, %s386
          %s389 = sshll.u32 %s387, 4
          %s390 = int_to_ptr.hbm [resolvable:$true] %s389
          %s391 = sshll.u32 %s382, 4
          %s392 = int_to_ptr.vmem [resolvable:$true] %s391
          %394 = dma.hbm_to_vmem [thread:$0]  %s390, 128, %s392, %s379
        $region48: #{tpu_custom_call.1} parent=39 // pred_fallthru
          _
      $region40: #{tpu_custom_call.1} parent=5 // pred_fallthru
        _
      %p395 = scmp.le.s32.totalorder 1, %s29
      %p396 = scmp.lt.s32.totalorder %s29, 3
      %p397 = pnand %p395, %p396
      %p398 = pneg %p397
      // Predicated region
      $region49: #{tpu_custom_call.1} parent=5 // pred_check
        _
      $region50: #{tpu_custom_call.1} parent=5 // pred_check_branch
        %400 = sbr.rel (%p397) target = $region52
      $region51: #{tpu_custom_call.1} parent=5 // pred_region
        %s401 = ssub.s32 %s29, 1
        %s402 = sand.u32 %s61, 1
        %s403 = scalar_lea.sflag [#allocation4], %s402
        %s404 = sand.u32 %s61, 1
        %s405 = smul.addr %s404, 8
        %s406 = scalar_lea.vmem [#allocation3], %s405
        // Predicated region
        $region53: #{tpu_custom_call.1} parent=51 // pred_check
          %p407 = pneg %p74
        $region54: #{tpu_custom_call.1} parent=51 // pred_check_branch
          %409 = sbr.rel (%p407) target = $region56
        $region55: #{tpu_custom_call.1} parent=51 // pred_region
          %411 = dma.done %s403, 128
        $region56: #{tpu_custom_call.1} parent=51 // pred_fallthru
          _
        %s412 = sand.u32 %s34, 1
        %s413 = scalar_lea.sflag [#allocation7], %s412
        %s414 = sand.u32 %s89, 1
        %s415 = smul.addr %s414, 8
        %s416 = scalar_lea.vmem [#allocation6], %s415
        // Predicated region
        $region57: #{tpu_custom_call.1} parent=51 // pred_check
          %p417 = pneg %p102
        $region58: #{tpu_custom_call.1} parent=51 // pred_check_branch
          %419 = sbr.rel (%p417) target = $region60
        $region59: #{tpu_custom_call.1} parent=51 // pred_region
          %421 = dma.done %s413, 128
        $region60: #{tpu_custom_call.1} parent=51 // pred_fallthru
          _
        // Predicated region
        $region61: #{tpu_custom_call.1} parent=51 // pred_check
          %p422 = pneg %p123
        $region62: #{tpu_custom_call.1} parent=51 // pred_check_branch
          %424 = sbr.rel (%p422) target = $region64
        $region63: #{tpu_custom_call.1} parent=51 // pred_region
          %426 = dma.done [#allocation7], 512
        $region64: #{tpu_custom_call.1} parent=51 // pred_fallthru
          _
        // Predicated region
        $region65: #{tpu_custom_call.1} parent=51 // pred_check
          %p427 = pneg %p165
        $region66: #{tpu_custom_call.1} parent=51 // pred_check_branch
          %429 = sbr.rel (%p427) target = $region68
        $region67: #{tpu_custom_call.1} parent=51 // pred_region
          %431 = dma.done [#allocation10], 512
        $region68: #{tpu_custom_call.1} parent=51 // pred_fallthru
          _
        // Predicated region
        $region69: #{tpu_custom_call.1} parent=51 // pred_check
          %p432 = pneg %p207
        $region70: #{tpu_custom_call.1} parent=51 // pred_check_branch
          %434 = sbr.rel (%p432) target = $region72
        $region71: #{tpu_custom_call.1} parent=51 // pred_region
          %436 = dma.done [#allocation10], 512
        $region72: #{tpu_custom_call.1} parent=51 // pred_fallthru
          _
        %s437 = sand.u32 %s61, 1
        %s438 = scalar_lea.sflag [#allocation4], %s437
        %s439 = sand.u32 %s61, 1
        %s440 = smul.addr %s439, 8
        %s441 = scalar_lea.vmem [#allocation3], %s440
        %p442 = pneg %p74
        %p443 = pneg %p71
        %s444 = sand.u32 %s34, 1
        %s445 = scalar_lea.sflag [#allocation7], %s444
        %s446 = sand.u32 %s89, 1
        %s447 = smul.addr %s446, 8
        %s448 = scalar_lea.vmem [#allocation6], %s447
        %p449 = pneg %p102
        %p450 = pneg %p99
        %p451 = pneg %p123
        %p452 = pneg %p120
        %p453 = pneg %p144
        %p454 = pneg %p141
        %p455 = pneg %p165
        %p456 = pneg %p162
        %p457 = pneg %p186
        %p458 = pneg %p183
        %p459 = pneg %p207
        %p460 = pneg %p204
        %p461 = pneg %p228
        %p462 = pneg %p225
        %p463 = pneg %p256
        %p464 = pneg %p253
        %s465 = sand.u32 %s243, 1
        %s466 = scalar_lea.sflag [#allocation5], %s465
        %s467 = sand.u32 %s243, 1
        %s468 = smul.addr %s467, 8
        %s469 = scalar_lea.vmem [#allocation12], %s468
        %p470 = pneg %p286
        %p471 = pneg %p283
        %s472 = sand.u32 %s273, 1
        %s473 = scalar_lea.sflag [#allocation14], %s472
        %s474 = sand.u32 %s273, 1
        %s475 = smul.addr %s474, 32
        %s476 = scalar_lea.vmem [#allocation13], %s475
        %s477 = smul.u32 4, %s41
        %v478 = vld [vmem:[%s406] sm:$0xff]
        %s479 = smul.u32 %s41, 32
        %s480 = scalar_lea.vmem [#allocation8], %s479
        %v481 = vld [vmem:[%s480] sm:$0xff]
        %v482 = vld [vmem:[%s480 + $0x8] sm:$0xff]
        %v483 = vld [vmem:[%s480 + $0x10] sm:$0xff]
        %v484 = vld [vmem:[%s480 + $0x18] sm:$0xff]
        %s485 = scalar_lea.vmem %s3, %s41
        %v486 = vld [vmem:[%s485] sm:$0x1]
        %s487 = scalar_lea.vmem [#allocation9], %s479
        %v488 = vld [vmem:[%s487] sm:$0xff]
        %v489 = vld [vmem:[%s487 + $0x8] sm:$0xff]
        %v490 = vld [vmem:[%s487 + $0x10] sm:$0xff]
        %v491 = vld [vmem:[%s487 + $0x18] sm:$0xff]
        %s492 = scalar_lea.vmem %s5, %s41
        %v493 = vld [vmem:[%s492] sm:$0x1]
        %s494 = scalar_lea.vmem [#allocation11], %s479
        %v495 = vld [vmem:[%s494] sm:$0xff]
        %v496 = vld [vmem:[%s494 + $0x8] sm:$0xff]
        %v497 = vld [vmem:[%s494 + $0x10] sm:$0xff]
        %v498 = vld [vmem:[%s494 + $0x18] sm:$0xff]
        %v500 = vperm.slane %v486, 0
        %vm502 = vcmask 261120
        %v504 = vsel %vm502, %v478, 0
        %506 = vmatpush.msra.mxu0 0.0
        %507 = vmatpush.msra.mxu0 0.0
        %508 = vmatpush.msra.mxu0 0.0
        %509 = vmatpush.msra.mxu0 0.0
        %510 = vmatpush.msra.mxu0 0.0
        %511 = vmatpush.msra.mxu0 0.0
        %512 = vmatpush.msra.mxu0 0.0
        %513 = vmatpush.msra.mxu0 0.0
        %514 = vmatpush.msra.mxu0 0.0
        %515 = vmatpush.msra.mxu0 0.0
        %516 = vmatpush.msra.mxu0 0.0
        %517 = vmatpush.msra.mxu0 0.0
        %518 = vmatpush.msra.mxu0 %v484
        %519 = vmatpush.msra.mxu0 %v483
        %520 = vmatpush.msra.mxu0 %v482
        %521 = vmatpush.msra.mxu0 %v481
        %522 = vmatmul.f32.gmra.mxu0 %v504
        %v523 = vpop.f32.mrf.mxu0
        %v524 = vadd.f32 %v500, %v523
        %525 = vdwg.mxu0
        %v527 = vperm.slane %v493, 0
        %529 = vmatpush.msra.mxu0 0.0
        %530 = vmatpush.msra.mxu0 0.0
        %531 = vmatpush.msra.mxu0 0.0
        %532 = vmatpush.msra.mxu0 0.0
        %533 = vmatpush.msra.mxu0 0.0
        %534 = vmatpush.msra.mxu0 0.0
        %535 = vmatpush.msra.mxu0 0.0
        %536 = vmatpush.msra.mxu0 0.0
        %537 = vmatpush.msra.mxu0 0.0
        %538 = vmatpush.msra.mxu0 0.0
        %539 = vmatpush.msra.mxu0 0.0
        %540 = vmatpush.msra.mxu0 0.0
        %541 = vmatpush.msra.mxu0 %v491
        %542 = vmatpush.msra.mxu0 %v490
        %543 = vmatpush.msra.mxu0 %v489
        %544 = vmatpush.msra.mxu0 %v488
        %545 = vmatmul.f32.gmra.mxu0 %v504
        %v546 = vpop.f32.mrf.mxu0
        %v547 = vadd.f32 %v527, %v546
        %548 = vdwg.mxu0
        %v549 = vld [vmem:[%s416] sm:$0xff]
        %vm550 = vcmask 64512
        %v552 = vsel %vm550, %v524, 0
        %v555 = vsel %vm550, %v547, 0
        %557 = vmatpush.xpose.msra.mxu0 0.0
        %558 = vmatpush.xpose.msra.mxu0 0.0
        %559 = vmatpush.xpose.msra.mxu0 0.0
        %560 = vmatpush.xpose.msra.mxu0 0.0
        %561 = vmatpush.xpose.msra.mxu0 0.0
        %562 = vmatpush.xpose.msra.mxu0 0.0
        %563 = vmatpush.xpose.msra.mxu0 0.0
        %564 = vmatpush.xpose.msra.mxu0 0.0
        %565 = vmatpush.xpose.msra.mxu0 0.0
        %566 = vmatpush.xpose.msra.mxu0 0.0
        %567 = vmatpush.xpose.msra.mxu0 0.0
        %568 = vmatpush.xpose.msra.mxu0 0.0
        %569 = vmatpush.xpose.msra.mxu0 0.0
        %570 = vmatpush.xpose.msra.mxu0 0.0
        %571 = vmatpush.xpose.msra.mxu0 0.0
        %572 = vmatpush.xpose.msra.mxu0 %v555
        %573 = vmatmul.f32.gmra.mxu0 %v552
        %v574 = vpop.f32.mrf.mxu0
        %v575 = vadd.f32 %v549, %v574
        %576 = vdwg.mxu0
        %v577 = vsel %vm550, %v575, -inf
        %578 = vmax.xlane.f32.xlu0 %v577
        %v579 = vpop.xlane.xlu0 %578
        %v580 = vsub.f32 %v575, %v579
        %v581 = vmul.f32 %v580, 1.442695
        %v582 = vpow.pop %v581
        %v583 = vsel %vm550, %v582, 0.0
        %584 = vadd.xlane.f32.xlu0 %v583
        %v585 = vpop.xlane.xlu0 %584
        %v586 = vrcp.pop %v585
        %v587 = vmul.f32 %v585, %v586
        %v588 = vsub.f32 1.0, %v587
        %v589 = vmul.f32 %v586, %v588
        %v590 = vadd.f32 %v586, %v589
        %vm591 = vweird.f32 %v585
        %vm592 = vweird.f32 %v586
        %vm593 = vmor %vm591, %vm592
        %v594 = vsel %vm593, %v586, %v590
        %v595 = vand.u32 2147483647, %v585
        %vm596 = vcmp.eq.f32.partialorder %v595, 8.507059e+37
        %v597 = vand.u32 %v585, 2147483648
        %v598 = vor.u32 1.1754944e-38, %v597
        %v599 = vsel %vm596, %v598, %v594
        %v600 = vmul.f32 %v582, %v599
        %601 = vst.msk [vmem:[%s476] sm:$0xff] %vm550, %v600
        %602 = vrot.lane.b32.xlu0 %v547, 96
        %v603 = vpop.permute.xlu0 %602
        %v606 = vsel %vm550, %v600, 0
        %608 = vmatpush.msra.mxu0 0.0
        %609 = vmatpush.msra.mxu0 0.0
        %610 = vmatpush.msra.mxu0 0.0
        %611 = vmatpush.msra.mxu0 0.0
        %612 = vmatpush.msra.mxu0 0.0
        %613 = vmatpush.msra.mxu0 0.0
        %614 = vmatpush.msra.mxu0 0.0
        %615 = vmatpush.msra.mxu0 0.0
        %616 = vmatpush.msra.mxu0 0.0
        %617 = vmatpush.msra.mxu0 0.0
        %618 = vmatpush.msra.mxu0 0.0
        %619 = vmatpush.msra.mxu0 0.0
        %620 = vmatpush.msra.mxu0 0.0
        %621 = vmatpush.msra.mxu0 0.0
        %622 = vmatpush.msra.mxu0 0.0
        %623 = vmatpush.msra.mxu0 %v603
        %624 = vmatmul.f32.gmra.mxu0 %v606
        %v625 = vpop.f32.mrf.mxu0
        %v626 = vadd.f32 0.0, %v625
        %627 = vdwg.mxu0
        %628 = vrot.lane.b32.xlu0 %v524, 120
        %v629 = vpop.permute.xlu0 %628
        %630 = vrot.lane.b32.xlu0 %v547, 120
        %v631 = vpop.permute.xlu0 %630
        %v632 = vsel %vm550, %v629, 0
        %v634 = vsel %vm550, %v631, 0
        %636 = vmatpush.xpose.msra.mxu0 0.0
        %637 = vmatpush.xpose.msra.mxu0 0.0
        %638 = vmatpush.xpose.msra.mxu0 0.0
        %639 = vmatpush.xpose.msra.mxu0 0.0
        %640 = vmatpush.xpose.msra.mxu0 0.0
        %641 = vmatpush.xpose.msra.mxu0 0.0
        %642 = vmatpush.xpose.msra.mxu0 0.0
        %643 = vmatpush.xpose.msra.mxu0 0.0
        %644 = vmatpush.xpose.msra.mxu0 0.0
        %645 = vmatpush.xpose.msra.mxu0 0.0
        %646 = vmatpush.xpose.msra.mxu0 0.0
        %647 = vmatpush.xpose.msra.mxu0 0.0
        %648 = vmatpush.xpose.msra.mxu0 0.0
        %649 = vmatpush.xpose.msra.mxu0 0.0
        %650 = vmatpush.xpose.msra.mxu0 0.0
        %651 = vmatpush.xpose.msra.mxu0 %v634
        %652 = vmatmul.f32.gmra.mxu0 %v632
        %v653 = vpop.f32.mrf.mxu0
        %v654 = vadd.f32 %v549, %v653
        %655 = vdwg.mxu0
        %v656 = vsel %vm550, %v654, -inf
        %657 = vmax.xlane.f32.xlu0 %v656
        %v658 = vpop.xlane.xlu0 %657
        %v659 = vsub.f32 %v654, %v658
        %v660 = vmul.f32 %v659, 1.442695
        %v661 = vpow.pop %v660
        %v662 = vsel %vm550, %v661, 0.0
        %663 = vadd.xlane.f32.xlu0 %v662
        %v664 = vpop.xlane.xlu0 %663
        %v665 = vrcp.pop %v664
        %v666 = vmul.f32 %v664, %v665
        %v667 = vsub.f32 1.0, %v666
        %v668 = vmul.f32 %v665, %v667
        %v669 = vadd.f32 %v665, %v668
        %vm670 = vweird.f32 %v664
        %vm671 = vweird.f32 %v665
        %vm672 = vmor %vm670, %vm671
        %v673 = vsel %vm672, %v665, %v669
        %v674 = vand.u32 2147483647, %v664
        %vm675 = vcmp.eq.f32.partialorder %v674, 8.507059e+37
        %v676 = vand.u32 %v664, 2147483648
        %v677 = vor.u32 1.1754944e-38, %v676
        %v678 = vsel %vm675, %v677, %v673
        %v679 = vmul.f32 %v661, %v678
        %s680 = scalar_lea.vmem %s476, 8 [#allocation13]
        %681 = vst.msk [vmem:[%s680] sm:$0xff] %vm550, %v679
        %682 = vrot.lane.b32.xlu0 %v547, 88
        %v683 = vpop.permute.xlu0 %682
        %v686 = vsel %vm550, %v679, 0
        %688 = vmatpush.msra.mxu0 0.0
        %689 = vmatpush.msra.mxu0 0.0
        %690 = vmatpush.msra.mxu0 0.0
        %691 = vmatpush.msra.mxu0 0.0
        %692 = vmatpush.msra.mxu0 0.0
        %693 = vmatpush.msra.mxu0 0.0
        %694 = vmatpush.msra.mxu0 0.0
        %695 = vmatpush.msra.mxu0 0.0
        %696 = vmatpush.msra.mxu0 0.0
        %697 = vmatpush.msra.mxu0 0.0
        %698 = vmatpush.msra.mxu0 0.0
        %699 = vmatpush.msra.mxu0 0.0
        %700 = vmatpush.msra.mxu0 0.0
        %701 = vmatpush.msra.mxu0 0.0
        %702 = vmatpush.msra.mxu0 0.0
        %703 = vmatpush.msra.mxu0 %v683
        %704 = vmatmul.f32.gmra.mxu0 %v686
        %v705 = vpop.f32.mrf.mxu0
        %v706 = vadd.f32 0.0, %v705
        %707 = vdwg.mxu0
        %708 = vrot.lane.b32.xlu0 %v524, 112
        %v709 = vpop.permute.xlu0 %708
        %710 = vrot.lane.b32.xlu0 %v547, 112
        %v711 = vpop.permute.xlu0 %710
        %v712 = vsel %vm550, %v709, 0
        %v714 = vsel %vm550, %v711, 0
        %716 = vmatpush.xpose.msra.mxu0 0.0
        %717 = vmatpush.xpose.msra.mxu0 0.0
        %718 = vmatpush.xpose.msra.mxu0 0.0
        %719 = vmatpush.xpose.msra.mxu0 0.0
        %720 = vmatpush.xpose.msra.mxu0 0.0
        %721 = vmatpush.xpose.msra.mxu0 0.0
        %722 = vmatpush.xpose.msra.mxu0 0.0
        %723 = vmatpush.xpose.msra.mxu0 0.0
        %724 = vmatpush.xpose.msra.mxu0 0.0
        %725 = vmatpush.xpose.msra.mxu0 0.0
        %726 = vmatpush.xpose.msra.mxu0 0.0
        %727 = vmatpush.xpose.msra.mxu0 0.0
        %728 = vmatpush.xpose.msra.mxu0 0.0
        %729 = vmatpush.xpose.msra.mxu0 0.0
        %730 = vmatpush.xpose.msra.mxu0 0.0
        %731 = vmatpush.xpose.msra.mxu0 %v714
        %732 = vmatmul.f32.gmra.mxu0 %v712
        %v733 = vpop.f32.mrf.mxu0
        %v734 = vadd.f32 %v549, %v733
        %735 = vdwg.mxu0
        %v736 = vsel %vm550, %v734, -inf
        %737 = vmax.xlane.f32.xlu0 %v736
        %v738 = vpop.xlane.xlu0 %737
        %v739 = vsub.f32 %v734, %v738
        %v740 = vmul.f32 %v739, 1.442695
        %v741 = vpow.pop %v740
        %v742 = vsel %vm550, %v741, 0.0
        %743 = vadd.xlane.f32.xlu0 %v742
        %v744 = vpop.xlane.xlu0 %743
        %v745 = vrcp.pop %v744
        %v746 = vmul.f32 %v744, %v745
        %v747 = vsub.f32 1.0, %v746
        %v748 = vmul.f32 %v745, %v747
        %v749 = vadd.f32 %v745, %v748
        %vm750 = vweird.f32 %v744
        %vm751 = vweird.f32 %v745
        %vm752 = vmor %vm750, %vm751
        %v753 = vsel %vm752, %v745, %v749
        %v754 = vand.u32 2147483647, %v744
        %vm755 = vcmp.eq.f32.partialorder %v754, 8.507059e+37
        %v756 = vand.u32 %v744, 2147483648
        %v757 = vor.u32 1.1754944e-38, %v756
        %v758 = vsel %vm755, %v757, %v753
        %v759 = vmul.f32 %v741, %v758
        %s760 = scalar_lea.vmem %s476, 16 [#allocation13]
        %761 = vst.msk [vmem:[%s760] sm:$0xff] %vm550, %v759
        %762 = vrot.lane.b32.xlu0 %v547, 80
        %v763 = vpop.permute.xlu0 %762
        %v766 = vsel %vm550, %v759, 0
        %768 = vmatpush.msra.mxu0 0.0
        %769 = vmatpush.msra.mxu0 0.0
        %770 = vmatpush.msra.mxu0 0.0
        %771 = vmatpush.msra.mxu0 0.0
        %772 = vmatpush.msra.mxu0 0.0
        %773 = vmatpush.msra.mxu0 0.0
        %774 = vmatpush.msra.mxu0 0.0
        %775 = vmatpush.msra.mxu0 0.0
        %776 = vmatpush.msra.mxu0 0.0
        %777 = vmatpush.msra.mxu0 0.0
        %778 = vmatpush.msra.mxu0 0.0
        %779 = vmatpush.msra.mxu0 0.0
        %780 = vmatpush.msra.mxu0 0.0
        %781 = vmatpush.msra.mxu0 0.0
        %782 = vmatpush.msra.mxu0 0.0
        %783 = vmatpush.msra.mxu0 %v763
        %784 = vmatmul.f32.gmra.mxu0 %v766
        %v785 = vpop.f32.mrf.mxu0
        %v786 = vadd.f32 0.0, %v785
        %787 = vdwg.mxu0
        %788 = vrot.lane.b32.xlu0 %v524, 104
        %v789 = vpop.permute.xlu0 %788
        %790 = vrot.lane.b32.xlu0 %v547, 104
        %v791 = vpop.permute.xlu0 %790
        %v792 = vsel %vm550, %v789, 0
        %v794 = vsel %vm550, %v791, 0
        %796 = vmatpush.xpose.msra.mxu0 0.0
        %797 = vmatpush.xpose.msra.mxu0 0.0
        %798 = vmatpush.xpose.msra.mxu0 0.0
        %799 = vmatpush.xpose.msra.mxu0 0.0
        %800 = vmatpush.xpose.msra.mxu0 0.0
        %801 = vmatpush.xpose.msra.mxu0 0.0
        %802 = vmatpush.xpose.msra.mxu0 0.0
        %803 = vmatpush.xpose.msra.mxu0 0.0
        %804 = vmatpush.xpose.msra.mxu0 0.0
        %805 = vmatpush.xpose.msra.mxu0 0.0
        %806 = vmatpush.xpose.msra.mxu0 0.0
        %807 = vmatpush.xpose.msra.mxu0 0.0
        %808 = vmatpush.xpose.msra.mxu0 0.0
        %809 = vmatpush.xpose.msra.mxu0 0.0
        %810 = vmatpush.xpose.msra.mxu0 0.0
        %811 = vmatpush.xpose.msra.mxu0 %v794
        %812 = vmatmul.f32.gmra.mxu0 %v792
        %v813 = vpop.f32.mrf.mxu0
        %v814 = vadd.f32 %v549, %v813
        %815 = vdwg.mxu0
        %v816 = vsel %vm550, %v814, -inf
        %817 = vmax.xlane.f32.xlu0 %v816
        %v818 = vpop.xlane.xlu0 %817
        %v819 = vsub.f32 %v814, %v818
        %v820 = vmul.f32 %v819, 1.442695
        %v821 = vpow.pop %v820
        %v822 = vsel %vm550, %v821, 0.0
        %823 = vadd.xlane.f32.xlu0 %v822
        %v824 = vpop.xlane.xlu0 %823
        %v825 = vrcp.pop %v824
        %v826 = vmul.f32 %v824, %v825
        %v827 = vsub.f32 1.0, %v826
        %v828 = vmul.f32 %v825, %v827
        %v829 = vadd.f32 %v825, %v828
        %vm830 = vweird.f32 %v824
        %vm831 = vweird.f32 %v825
        %vm832 = vmor %vm830, %vm831
        %v833 = vsel %vm832, %v825, %v829
        %v834 = vand.u32 2147483647, %v824
        %vm835 = vcmp.eq.f32.partialorder %v834, 8.507059e+37
        %v836 = vand.u32 %v824, 2147483648
        %v837 = vor.u32 1.1754944e-38, %v836
        %v838 = vsel %vm835, %v837, %v833
        %v839 = vmul.f32 %v821, %v838
        %s840 = scalar_lea.vmem %s476, 24 [#allocation13]
        %841 = vst.msk [vmem:[%s840] sm:$0xff] %vm550, %v839
        %842 = vrot.lane.b32.xlu0 %v547, 72
        %v843 = vpop.permute.xlu0 %842
        %v846 = vsel %vm550, %v839, 0
        %848 = vmatpush.msra.mxu0 0.0
        %849 = vmatpush.msra.mxu0 0.0
        %850 = vmatpush.msra.mxu0 0.0
        %851 = vmatpush.msra.mxu0 0.0
        %852 = vmatpush.msra.mxu0 0.0
        %853 = vmatpush.msra.mxu0 0.0
        %854 = vmatpush.msra.mxu0 0.0
        %855 = vmatpush.msra.mxu0 0.0
        %856 = vmatpush.msra.mxu0 0.0
        %857 = vmatpush.msra.mxu0 0.0
        %858 = vmatpush.msra.mxu0 0.0
        %859 = vmatpush.msra.mxu0 0.0
        %860 = vmatpush.msra.mxu0 0.0
        %861 = vmatpush.msra.mxu0 0.0
        %862 = vmatpush.msra.mxu0 0.0
        %863 = vmatpush.msra.mxu0 %v843
        %864 = vmatmul.f32.gmra.mxu0 %v846
        %v865 = vpop.f32.mrf.mxu0
        %v866 = vadd.f32 0.0, %v865
        %867 = vdwg.mxu0
        %869 = vrot.lane.b32.xlu0 %v706, 8
        %v870 = vpop.permute.xlu0 %869
        %873 = vrot.lane.b32.xlu0 %v786, 16
        %v874 = vpop.permute.xlu0 %873
        %877 = vrot.lane.b32.xlu0 %v866, 24
        %v878 = vpop.permute.xlu0 %877
        %v880 = vsel %vm550, %v626, %v870
        %vm881 = vcmask 130048
        %v882 = vsel %vm881, %v880, %v874
        %vm883 = vcmask 195584
        %v884 = vsel %vm883, %v882, %v878
        %v886 = vsel %vm502, %v884, 0
        %888 = vmatpush.msra.mxu0 0.0
        %889 = vmatpush.msra.mxu0 0.0
        %890 = vmatpush.msra.mxu0 0.0
        %891 = vmatpush.msra.mxu0 0.0
        %892 = vmatpush.msra.mxu0 0.0
        %893 = vmatpush.msra.mxu0 0.0
        %894 = vmatpush.msra.mxu0 0.0
        %895 = vmatpush.msra.mxu0 0.0
        %896 = vmatpush.msra.mxu0 0.0
        %897 = vmatpush.msra.mxu0 0.0
        %898 = vmatpush.msra.mxu0 0.0
        %899 = vmatpush.msra.mxu0 0.0
        %900 = vmatpush.msra.mxu0 %v498
        %901 = vmatpush.msra.mxu0 %v497
        %902 = vmatpush.msra.mxu0 %v496
        %903 = vmatpush.msra.mxu0 %v495
        %904 = vmatmul.f32.gmra.mxu0 %v886
        %v905 = vpop.f32.mrf.mxu0
        %v906 = vadd.f32 0.0, %v905
        %907 = vdwg.mxu0
        %p908 = scmp.eq.s32.totalorder %s41, 0
        // Predicated region
        $region73: #{tpu_custom_call.1} parent=51 // pred_check
          %p909 = pneg %p908
        $region74: #{tpu_custom_call.1} parent=51 // pred_check_branch
          %911 = sbr.rel (%p909) target = $region76
        $region75: #{tpu_custom_call.1} parent=51 // pred_region
          %v912 = vld [vmem:[%s7] sm:$0x1]
          %v914 = vperm.slane %v912, 0
          %916 = vst.msk [vmem:[#allocation2] sm:$0xff] %vm502, %v914
        $region76: #{tpu_custom_call.1} parent=51 // pred_fallthru
          _
        %v917 = vld [vmem:[#allocation2] sm:$0xff]
        %v918 = vadd.f32 %v917, %v906
        %919 = vst.msk [vmem:[#allocation2] sm:$0xff] %vm502, %v918
        // Predicated region
        $region77: #{tpu_custom_call.1} parent=51 // pred_check
          %p920 = pneg %p908
        $region78: #{tpu_custom_call.1} parent=51 // pred_check_branch
          %922 = sbr.rel (%p920) target = $region80
        $region79: #{tpu_custom_call.1} parent=51 // pred_region
          %v923 = vld [vmem:[#allocation2] sm:$0xff]
          %924 = vst.msk [vmem:[%s469] sm:$0xff] %vm502, %v923
        $region80: #{tpu_custom_call.1} parent=51 // pred_fallthru
          _
        %s925 = sand.u32 %s243, 1
        %s926 = scalar_lea.sflag [#allocation5], %s925
        %s927 = sand.u32 %s243, 1
        %s928 = smul.addr %s927, 8
        %s929 = scalar_lea.vmem [#allocation12], %s928
        %s930 = sand.u32 %s273, 1
        %s931 = scalar_lea.sflag [#allocation14], %s930
        %s932 = sand.u32 %s273, 1
        %s933 = smul.addr %s932, 32
        %s934 = scalar_lea.vmem [#allocation13], %s933
        // Predicated region
        $region81: #{tpu_custom_call.1} parent=51 // pred_check
          %p935 = pneg %p253
        $region82: #{tpu_custom_call.1} parent=51 // pred_check_branch
          %937 = sbr.rel (%p935) target = $region84
        $region83: #{tpu_custom_call.1} parent=51 // pred_region
          %939 = vsyncadd %s926, 0
          %s940 = sadd.s32 %s40, %s39
          %s941 = smul.addr %s940, 8
          %s942 = scalar_lea.hbm %s8, %s941
          %s944 = sshll.u32 %s929, 4
          %s945 = int_to_ptr.vmem [resolvable:$true] %s944
          %s946 = sshll.u32 %s942, 4
          %s947 = int_to_ptr.hbm [resolvable:$true] %s946
          %949 = dma.vmem_to_hbm [thread:$0]  %s945, 128, %s947, %s926
        $region84: #{tpu_custom_call.1} parent=51 // pred_fallthru
          _
        // Predicated region
        $region85: #{tpu_custom_call.1} parent=51 // pred_check
          %p950 = pneg %p283
        $region86: #{tpu_custom_call.1} parent=51 // pred_check_branch
          %952 = sbr.rel (%p950) target = $region88
        $region87: #{tpu_custom_call.1} parent=51 // pred_region
          %s953 = smul.u32 4, %s41
          %955 = vsyncadd %s931, 0
          %s956 = sadd.s32 %s40, %s953
          %s957 = smul.addr %s39, 4
          %s958 = sadd.s32 %s956, %s957
          %s959 = smul.addr %s958, 8
          %s960 = scalar_lea.hbm %s9, %s959
          %s961 = sshll.u32 %s934, 4
          %s962 = int_to_ptr.vmem [resolvable:$true] %s961
          %s963 = sshll.u32 %s960, 4
          %s964 = int_to_ptr.hbm [resolvable:$true] %s963
          %969 = dma.vmem_to_hbm [thread:$0]  %s962, 512, %s964, %s931, 128, 128, 8
        $region88: #{tpu_custom_call.1} parent=51 // pred_fallthru
          _
      $region52: #{tpu_custom_call.1} parent=5 // pred_fallthru
        _
      %p970 = scmp.le.s32.totalorder 2, %s29
      // Predicated region
      $region89: #{tpu_custom_call.1} parent=5 // pred_check
        %p971 = pneg %p970
      $region90: #{tpu_custom_call.1} parent=5 // pred_check_branch
        %973 = sbr.rel (%p971) target = $region92
      $region91: #{tpu_custom_call.1} parent=5 // pred_region
        %s974 = ssub.s32 %s29, 2
        // Predicated region
        $region93: #{tpu_custom_call.1} parent=91 // pred_check
          %p975 = pneg %p259
        $region94: #{tpu_custom_call.1} parent=91 // pred_check_branch
          %977 = sbr.rel (%p975) target = $region96
        $region95: #{tpu_custom_call.1} parent=91 // pred_region
          %s978 = sand.u32 %s244, 1
          %s979 = scalar_lea.sflag [#allocation5], %s978
          %s980 = sand.u32 %s244, 1
          %s981 = smul.addr %s980, 8
          %s982 = scalar_lea.vmem [#allocation12], %s981
          %984 = dma.done %s979, 128
        $region96: #{tpu_custom_call.1} parent=91 // pred_fallthru
          _
        // Predicated region
        $region97: #{tpu_custom_call.1} parent=91 // pred_check
          %p985 = pneg %p289
        $region98: #{tpu_custom_call.1} parent=91 // pred_check_branch
          %987 = sbr.rel (%p985) target = $region100
        $region99: #{tpu_custom_call.1} parent=91 // pred_region
          %s988 = sand.u32 %s274, 1
          %s989 = scalar_lea.sflag [#allocation14], %s988
          %s990 = sand.u32 %s274, 1
          %s991 = smul.addr %s990, 32
          %s992 = scalar_lea.vmem [#allocation13], %s991
          %994 = dma.done %s989, 512
        $region100: #{tpu_custom_call.1} parent=91 // pred_fallthru
          _
      $region92: #{tpu_custom_call.1} parent=5 // pred_fallthru
        _
    $region6: #{tpu_custom_call.1} parent=1 // loop_footer
      %s33 = sadd.s32 1, %s29
    $region7: #{tpu_custom_call.1} parent=1 // loop_footer_branch
      %28 = sbr.rel target = $region3
    $region8: #{tpu_custom_call.1} parent=1 // loop_exit
      _
    %995 = vsyncpa [#allocation4], 1
    %s996 = scalar_lea.sflag [#allocation4], 1
    %997 = vsyncpa %s996, 1
    %998 = vsyncpa [#allocation7], 1
    %s999 = scalar_lea.sflag [#allocation7], 1
    %1000 = vsyncpa %s999, 1
    %1001 = vsyncpa [#allocation10], 1
    %1002 = vsyncpa [#allocation5], 1
    %s1003 = scalar_lea.sflag [#allocation5], 1
    %1004 = vsyncpa %s1003, 1
    %1005 = vsyncpa [#allocation14], 1
    %s1006 = scalar_lea.sflag [#allocation14], 1
    %1007 = vsyncpa %s1006, 1

</llo_original>
